<compile_context>
chip_gen: v6e
topology: v6e:2x2x1
jax: 0.10.0
libtpu: 0.0.40
codegen_flags: <defaults>
</compile_context>

<pallas_src>
import functools
import itertools

import jax
import jax.numpy as jnp
import numpy as np
from jax.experimental import pallas as pl
from jax.experimental.pallas import tpu as pltpu


def _ts_corr_kernel(wm_ref, p1_ref, p2_ref, x_ref, o_ref, *, window, block_b):
    # wm_ref: (S, T) 0/1 window indicator, p1/p2_ref: (F, C) 0/1 pair selectors
    # x_ref:  (Bb, T, F) input block, o_ref: (Bb, S, C) lane-dense output.
    wm = wm_ref[...]
    p1 = p1_ref[...]
    p2 = p2_ref[...]

    inv_w = jnp.float32(1.0 / window)
    inv_wm1 = jnp.float32(1.0 / max(window - 1, 1))

    for bi in range(block_b):                      # static loop over batch rows
        x = x_ref[bi].astype(jnp.float32)          # (T, F)

        # Windowed first/second moments of raw features (MXU).
        sx = jnp.dot(wm, x, preferred_element_type=jnp.float32)        # (S, F)
        sxx = jnp.dot(wm, x * x, preferred_element_type=jnp.float32)   # (S, F)

        # Pair gather as 0/1 selection matmuls (MXU) + windowed E[xy].
        x1 = jnp.dot(x, p1, preferred_element_type=jnp.float32)        # (T, C)
        x2 = jnp.dot(x, p2, preferred_element_type=jnp.float32)        # (T, C)
        sab = jnp.dot(wm, x1 * x2, preferred_element_type=jnp.float32)  # (S, C)

        sum_a = jnp.dot(sx, p1, preferred_element_type=jnp.float32)    # (S, C)
        sum_b = jnp.dot(sx, p2, preferred_element_type=jnp.float32)
        sum_a2 = jnp.dot(sxx, p1, preferred_element_type=jnp.float32)
        sum_b2 = jnp.dot(sxx, p2, preferred_element_type=jnp.float32)

        mean_a = sum_a * inv_w
        mean_b = sum_b * inv_w
        # Unbiased (Bessel, /(W-1)) variance, clamped against fp cancellation.
        var_a = jnp.maximum(sum_a2 - sum_a * mean_a, 0.0) * inv_wm1
        var_b = jnp.maximum(sum_b2 - sum_b * mean_b, 0.0) * inv_wm1
        std_a = jnp.sqrt(var_a) + 1e-05
        std_b = jnp.sqrt(var_b) + 1e-05

        cov = sab * inv_w - mean_a * mean_b
        o_ref[bi] = (cov / (std_a * std_b)).astype(o_ref.dtype)


def ts_corr(tensors, window=5, strides=1, block_b=None):
    """Pallas implementation of the PyTorch ts_corr.forward. Returns (B, C, S)."""
    B, T, F = tensors.shape

    combos = list(itertools.combinations(range(F), 2))
    C = len(combos)

    starts = list(range(0, T - window + 1, strides))
    if (T - window) not in starts:
        starts.append(T - window)
    S = len(starts)

    if C == 0:  # F < 2: no feature pairs.
        return jnp.zeros((B, 0, S), dtype=tensors.dtype)

    # Static 0/1 constants (exact in any dtype): window indicator + selectors.
    wm_np = np.zeros((S, T), np.float32)
    for s, st in enumerate(starts):
        wm_np[s, st:st + window] = 1.0
    p1_np = np.zeros((F, C), np.float32)
    p2_np = np.zeros((F, C), np.float32)
    for c, (fi, fj) in enumerate(combos):
        p1_np[fi, c] = 1.0
        p2_np[fj, c] = 1.0
    wm = jnp.asarray(wm_np)
    p1 = jnp.asarray(p1_np)
    p2 = jnp.asarray(p2_np)

    itemsize = jnp.dtype(tensors.dtype).itemsize
    # Per-generation VMEM sizing (v7x: 64 MiB physical vs 128 MiB on v5e/v6e).
    try:
        vmem_cap = int(pltpu.get_tpu_info().vmem_capacity_bytes)
    except Exception:
        vmem_cap = 64 * 1024 * 1024  # conservative fallback
    vmem_limit = int(min((vmem_cap * 3) // 4, 96 * 1024 * 1024))

    if block_b is None:
        # Double-buffered input + output pipeline bytes per batch row.
        per_row = 2 * (T * F + S * C) * itemsize
        # f32 in-kernel temporaries (one row live at a time) + constants.
        scratch = 4 * (2 * T * F + 3 * T * C + 2 * S * F + 8 * S * C
                       + S * T + 2 * F * C)
        budget = vmem_limit // 2
        block_b = max(1, (budget - scratch) // max(per_row, 1))
        block_b = int(min(block_b, B, 128))
    # Keep >= 2 parallel grid steps when possible (v7x has 2 TensorCores).
    if B >= 2:
        block_b = min(block_b, pl.cdiv(B, 2))
    block_b = max(1, int(block_b))

    # Pad the batch so it divides evenly into blocks (padded rows give 0s).
    n_blocks = pl.cdiv(B, block_b)
    Bp = n_blocks * block_b
    x = tensors
    if Bp != B:
        x = jnp.pad(x, ((0, Bp - B), (0, 0), (0, 0)))

    kernel = functools.partial(_ts_corr_kernel, window=window, block_b=block_b)

    out = pl.pallas_call(
        kernel,
        grid=(n_blocks,),
        out_shape=jax.ShapeDtypeStruct((Bp, S, C), tensors.dtype),
        in_specs=[
            pl.BlockSpec((S, T), lambda b: (0, 0)),        # constant: no refetch
            pl.BlockSpec((F, C), lambda b: (0, 0)),
            pl.BlockSpec((F, C), lambda b: (0, 0)),
            pl.BlockSpec((block_b, T, F), lambda b: (b, 0, 0)),
        ],
        out_specs=pl.BlockSpec((block_b, S, C), lambda b: (b, 0, 0)),
        compiler_params=pltpu.CompilerParams(
            dimension_semantics=("parallel",),
            vmem_limit_bytes=vmem_limit),
    )(wm, p1, p2, x)

    out = out[:B]                                   # drop batch padding
    return jnp.transpose(out, (0, 2, 1))            # (B, S, C) -> (B, C, S)


def ts_corr_reference(tensors, window=5, strides=1):
    """Pure-JAX reference that mirrors the PyTorch loop exactly."""
    B, T, F = tensors.shape
    iter_list = list(range(0, T - window + 1, strides))
    if (T - window) not in iter_list:
        iter_list.append(T - window)

    xs = []
    for i_stride in iter_list:
        for (fi, fj) in itertools.combinations(range(F), 2):
            xw = tensors[:, i_stride:i_stride + window, fi]   # (B, W)
            yw = tensors[:, i_stride:i_stride + window, fj]   # (B, W)
            std_x = jnp.std(xw, axis=1, ddof=1) + 1e-05
            std_y = jnp.std(yw, axis=1, ddof=1) + 1e-05
            cov = (jnp.mean(xw * yw, axis=1)
                   - jnp.mean(xw, axis=1) * jnp.mean(yw, axis=1))
            xs.append(cov / (std_x * std_y))
    s_num = len(iter_list)
    c_num = F * (F - 1) // 2
    out = jnp.stack(xs, axis=1).reshape(-1, s_num, c_num)
    return jnp.transpose(out, (0, 2, 1))


if __name__ == "__main__":
    key = jax.random.PRNGKey(0)

    # Case 1: the standard small config.
    B, T, F = 2, 16, 4
    x = jax.random.normal(key, (B, T, F), dtype=jnp.float32)
    out = jax.block_until_ready(ts_corr(x, window=5, strides=1))
    ref = jax.block_until_ready(ts_corr_reference(x, window=5, strides=1))
    assert out.shape == ref.shape == (B, F * (F - 1) // 2, T - 5 + 1)
    np.testing.assert_allclose(np.asarray(out), np.asarray(ref),
                               rtol=1e-4, atol=1e-4)

    # Case 2: odd batch (exercises batch padding) + stride that forces the
    # appended final window position.
    key2 = jax.random.PRNGKey(1)
    x2 = jax.random.normal(key2, (3, 16, 4), dtype=jnp.float32)
    out2 = jax.block_until_ready(ts_corr(x2, window=5, strides=3))
    ref2 = jax.block_until_ready(ts_corr_reference(x2, window=5, strides=3))
    assert out2.shape == ref2.shape
    np.testing.assert_allclose(np.asarray(out2), np.asarray(ref2),
                               rtol=1e-4, atol=1e-4)

    print("KERNEL_OK")
</pallas_src>

<mosaic_0001>
module attributes {stable_mosaic.version = 11 : i64} {
  func.func @_ts_corr_kernel(%arg0: i32, %arg1: memref<12x16xf32, #tpu.memory_space<vmem>>, %arg2: memref<4x6xf32, #tpu.memory_space<vmem>>, %arg3: memref<4x6xf32, #tpu.memory_space<vmem>>, %arg4: memref<1x16x4xf32, #tpu.memory_space<vmem>>, %arg5: memref<1x12x6xf32, #tpu.memory_space<vmem>>) attributes {dimension_semantics = [#tpu.dimension_semantics<parallel>], iteration_bounds = array<i64: 2>, scalar_prefetch = 0 : i64, scratch_operands = 0 : i64, tpu.core_type = #tpu.core_type<tc>, window_params = [{pipeline_mode = #tpu.pipeline_mode<synchronous>, transform_indices = @transform_0, window_bounds = array<i64: 12, 16>}, {pipeline_mode = #tpu.pipeline_mode<synchronous>, transform_indices = @transform_1, window_bounds = array<i64: 4, 6>}, {pipeline_mode = #tpu.pipeline_mode<synchronous>, transform_indices = @transform_2, window_bounds = array<i64: 4, 6>}, {transform_indices = @transform_3, window_bounds = array<i64: 1, 16, 4>}, {transform_indices = @transform_4, window_bounds = array<i64: 1, 12, 6>}]} {
    %c0 = arith.constant 0 : index
    %c0_0 = arith.constant 0 : index
    %0 = vector.load %arg1[%c0, %c0_0] : memref<12x16xf32, #tpu.memory_space<vmem>>, vector<12x16xf32>
    %c0_1 = arith.constant 0 : index
    %c0_2 = arith.constant 0 : index
    %1 = vector.load %arg2[%c0_1, %c0_2] : memref<4x6xf32, #tpu.memory_space<vmem>>, vector<4x6xf32>
    %c0_3 = arith.constant 0 : index
    %c0_4 = arith.constant 0 : index
    %2 = vector.load %arg3[%c0_3, %c0_4] : memref<4x6xf32, #tpu.memory_space<vmem>>, vector<4x6xf32>
    %c0_5 = arith.constant 0 : index
    %c0_6 = arith.constant 0 : index
    %c0_7 = arith.constant 0 : index
    %3 = vector.load %arg4[%c0_5, %c0_6, %c0_7] : memref<1x16x4xf32, #tpu.memory_space<vmem>>, vector<1x16x4xf32>
    %4 = vector.shape_cast %3 : vector<1x16x4xf32> to vector<16x4xf32>
    %cst = arith.constant dense<0.000000e+00> : vector<12x4xf32>
    %5 = tpu.matmul %0, %4, %cst {dimension_numbers = #tpu.dot_dimension_numbers<[1], [0], [0], [1], [0, 0, 1, 1], [], []>} : vector<12x16xf32>, vector<16x4xf32>, vector<12x4xf32> -> vector<12x4xf32>
    %6 = arith.mulf %4, %4 : vector<16x4xf32>
    %cst_8 = arith.constant dense<0.000000e+00> : vector<12x4xf32>
    %7 = tpu.matmul %0, %6, %cst_8 {dimension_numbers = #tpu.dot_dimension_numbers<[1], [0], [0], [1], [0, 0, 1, 1], [], []>} : vector<12x16xf32>, vector<16x4xf32>, vector<12x4xf32> -> vector<12x4xf32>
    %cst_9 = arith.constant dense<0.000000e+00> : vector<16x6xf32>
    %8 = tpu.matmul %4, %1, %cst_9 {dimension_numbers = #tpu.dot_dimension_numbers<[1], [0], [0], [1], [0, 0, 1, 1], [], []>} : vector<16x4xf32>, vector<4x6xf32>, vector<16x6xf32> -> vector<16x6xf32>
    %cst_10 = arith.constant dense<0.000000e+00> : vector<16x6xf32>
    %9 = tpu.matmul %4, %2, %cst_10 {dimension_numbers = #tpu.dot_dimension_numbers<[1], [0], [0], [1], [0, 0, 1, 1], [], []>} : vector<16x4xf32>, vector<4x6xf32>, vector<16x6xf32> -> vector<16x6xf32>
    %10 = arith.mulf %8, %9 : vector<16x6xf32>
    %cst_11 = arith.constant dense<0.000000e+00> : vector<12x6xf32>
    %11 = tpu.matmul %0, %10, %cst_11 {dimension_numbers = #tpu.dot_dimension_numbers<[1], [0], [0], [1], [0, 0, 1, 1], [], []>} : vector<12x16xf32>, vector<16x6xf32>, vector<12x6xf32> -> vector<12x6xf32>
    %cst_12 = arith.constant dense<0.000000e+00> : vector<12x6xf32>
    %12 = tpu.matmul %5, %1, %cst_12 {dimension_numbers = #tpu.dot_dimension_numbers<[1], [0], [0], [1], [0, 0, 1, 1], [], []>} : vector<12x4xf32>, vector<4x6xf32>, vector<12x6xf32> -> vector<12x6xf32>
    %cst_13 = arith.constant dense<0.000000e+00> : vector<12x6xf32>
    %13 = tpu.matmul %5, %2, %cst_13 {dimension_numbers = #tpu.dot_dimension_numbers<[1], [0], [0], [1], [0, 0, 1, 1], [], []>} : vector<12x4xf32>, vector<4x6xf32>, vector<12x6xf32> -> vector<12x6xf32>
    %cst_14 = arith.constant dense<0.000000e+00> : vector<12x6xf32>
    %14 = tpu.matmul %7, %1, %cst_14 {dimension_numbers = #tpu.dot_dimension_numbers<[1], [0], [0], [1], [0, 0, 1, 1], [], []>} : vector<12x4xf32>, vector<4x6xf32>, vector<12x6xf32> -> vector<12x6xf32>
    %cst_15 = arith.constant dense<0.000000e+00> : vector<12x6xf32>
    %15 = tpu.matmul %7, %2, %cst_15 {dimension_numbers = #tpu.dot_dimension_numbers<[1], [0], [0], [1], [0, 0, 1, 1], [], []>} : vector<12x4xf32>, vector<4x6xf32>, vector<12x6xf32> -> vector<12x6xf32>
    %cst_16 = arith.constant 2.000000e-01 : f32
    %16 = vector.broadcast %cst_16 : f32 to vector<12x6xf32>
    %17 = arith.mulf %12, %16 : vector<12x6xf32>
    %cst_17 = arith.constant 2.000000e-01 : f32
    %18 = vector.broadcast %cst_17 : f32 to vector<12x6xf32>
    %19 = arith.mulf %13, %18 : vector<12x6xf32>
    %20 = arith.mulf %12, %17 : vector<12x6xf32>
    %21 = arith.subf %14, %20 : vector<12x6xf32>
    %cst_18 = arith.constant 0.000000e+00 : f32
    %22 = vector.broadcast %cst_18 : f32 to vector<12x6xf32>
    %23 = arith.maximumf %21, %22 : vector<12x6xf32>
    %cst_19 = arith.constant 2.500000e-01 : f32
    %24 = vector.broadcast %cst_19 : f32 to vector<12x6xf32>
    %25 = arith.mulf %23, %24 : vector<12x6xf32>
    %26 = arith.mulf %13, %19 : vector<12x6xf32>
    %27 = arith.subf %15, %26 : vector<12x6xf32>
    %cst_20 = arith.constant 0.000000e+00 : f32
    %28 = vector.broadcast %cst_20 : f32 to vector<12x6xf32>
    %29 = arith.maximumf %27, %28 : vector<12x6xf32>
    %cst_21 = arith.constant 2.500000e-01 : f32
    %30 = vector.broadcast %cst_21 : f32 to vector<12x6xf32>
    %31 = arith.mulf %29, %30 : vector<12x6xf32>
    %32 = math.sqrt %25 : vector<12x6xf32>
    %cst_22 = arith.constant 9.99999974E-6 : f32
    %33 = vector.broadcast %cst_22 : f32 to vector<12x6xf32>
    %34 = arith.addf %32, %33 : vector<12x6xf32>
    %35 = math.sqrt %31 : vector<12x6xf32>
    %cst_23 = arith.constant 9.99999974E-6 : f32
    %36 = vector.broadcast %cst_23 : f32 to vector<12x6xf32>
    %37 = arith.addf %35, %36 : vector<12x6xf32>
    %cst_24 = arith.constant 2.000000e-01 : f32
    %38 = vector.broadcast %cst_24 : f32 to vector<12x6xf32>
    %39 = arith.mulf %11, %38 : vector<12x6xf32>
    %40 = arith.mulf %17, %19 : vector<12x6xf32>
    %41 = arith.subf %39, %40 : vector<12x6xf32>
    %42 = arith.mulf %34, %37 : vector<12x6xf32>
    %43 = arith.divf %41, %42 : vector<12x6xf32>
    %c0_25 = arith.constant 0 : index
    %c0_26 = arith.constant 0 : index
    %c0_27 = arith.constant 0 : index
    %44 = vector.load %arg5[%c0_25, %c0_26, %c0_27] : memref<1x12x6xf32, #tpu.memory_space<vmem>>, vector<1x12x6xf32>
    %45 = vector.shape_cast %44 : vector<1x12x6xf32> to vector<12x6xf32>
    %46 = vector.shape_cast %43 : vector<12x6xf32> to vector<1x12x6xf32>
    tpu.vector_store %arg5[%c0_25, %c0_26, %c0_27], %46 {strides = array<i32>} : memref<1x12x6xf32, #tpu.memory_space<vmem>>, vector<1x12x6xf32>,
    return
  }
  func.func @transform_0(%arg0: i32) -> (i32, i32) {
    %c0_i32 = arith.constant 0 : i32
    %c0_i32_0 = arith.constant 0 : i32
    %c0_i32_1 = arith.constant 0 : i32
    return %c0_i32, %c0_i32_0 : i32, i32
  }
  func.func @transform_1(%arg0: i32) -> (i32, i32) {
    %c0_i32 = arith.constant 0 : i32
    %c0_i32_0 = arith.constant 0 : i32
    %c0_i32_1 = arith.constant 0 : i32
    return %c0_i32, %c0_i32_0 : i32, i32
  }
  func.func @transform_2(%arg0: i32) -> (i32, i32) {
    %c0_i32 = arith.constant 0 : i32
    %c0_i32_0 = arith.constant 0 : i32
    %c0_i32_1 = arith.constant 0 : i32
    return %c0_i32, %c0_i32_0 : i32, i32
  }
  func.func @transform_3(%arg0: i32) -> (i32, i32, i32) {
    %c0_i32 = arith.constant 0 : i32
    %c0_i32_0 = arith.constant 0 : i32
    %c0_i32_1 = arith.constant 0 : i32
    return %arg0, %c0_i32, %c0_i32_0 : i32, i32, i32
  }
  func.func @transform_4(%arg0: i32) -> (i32, i32, i32) {
    %c0_i32 = arith.constant 0 : i32
    %c0_i32_0 = arith.constant 0 : i32
    %c0_i32_1 = arith.constant 0 : i32
    return %arg0, %c0_i32, %c0_i32_0 : i32, i32, i32
  }
}

</mosaic_0001>

<llo_original>
// kernel: tpu_custom_call.1
$region0: #{tpu_custom_call.1}
  #allocation0 [shape = 'u32[]', space=smem, size = 0x4, offset = 0x4, fixed_abs, tag = 'smem constant byte address 0x4 - core index']
  #allocation1 [shape = 'u32[144,128]{1,0:T(1,128)}', space=vmem, size = 0x12000, scoped, tag = 'internal scratch']
  %s0 = inlined_call_operand.vmem [shape: f32[12,16], index: 0, kind: input, shape index: {}]
  %s1 = inlined_call_operand.vmem [shape: f32[4,6], index: 1, kind: input, shape index: {}]
  %s2 = inlined_call_operand.vmem [shape: f32[4,6], index: 2, kind: input, shape index: {}]
  %s3 = inlined_call_operand.vmem [shape: f32[2,16,4], index: 3, kind: input, shape index: {}]
  %s4 = inlined_call_operand.vmem [shape: f32[2,12,6], index: 4, kind: output, shape index: {}]
  %s5 = sld [smem:[#allocation0]]
  $region49: #{tpu_custom_call.1} parent=0
    _
  %s7 = ssub.s32 1, %s5
  %s8 = scalar_select 0, %s7, %s5
  loop: start=0, step=1, limit=4
  $region2: #{tpu_custom_call.1} parent=0 // loop_pre_header
    _
  $region3: #{tpu_custom_call.1} parent=0 // loop_header
    %s10 = sphi 0, %s14
    %p11 = scmp.ge.s32.totalorder %s10, 4
    %s18 = sphi 0, %s18
    %s20 = sphi 0, %s18
    %s21 = sphi 0, %s20
    %s35 = sphi 0, %s21
    %s39 = sphi 0, %s39
    %s41 = sphi 0, %s39
    %s42 = sphi 0, %s41
    %s56 = sphi 0, %s42
    %s60 = sphi 0, %s60
    %s62 = sphi 0, %s60
    %s63 = sphi 0, %s62
    %s77 = sphi 0, %s63
    %s83 = sphi 0, %s85
    %s86 = sphi 0, %s83
    %s87 = sphi 0, %s86
    %s103 = sphi 0, %s87
    %s109 = sphi 0, %s111
    %s112 = sphi 0, %s109
    %s113 = sphi 0, %s112
    %s129 = sphi 0, %s113
  $region4: #{tpu_custom_call.1} parent=0 // loop_header_branch
    %13 = sbr.rel (%p11) target = $region8
  $region5: #{tpu_custom_call.1} parent=0 // loop_body
    %s15 = ssub.s32 %s10, 1
    %s16 = ssub.s32 %s10, 2
    %s17 = sadd.s32 %s10, 1
    %s19 = sadd.s32 %s18, 1
    %p22 = scmp.eq.s32.totalorder %s10, 1
    %p23 = scmp.ne.s32.totalorder %s18, %s20
    %p24 = scmp.eq.s32.totalorder %s10, 0
    %p25 = por %p23, %p24
    %p26 = scmp.ne.s32.totalorder %s18, %s20
    %p27 = scmp.eq.s32.totalorder %s15, 1
    %p28 = por %p26, %p27
    %p29 = scmp.ne.s32.totalorder %s20, %s21
    %p30 = scmp.eq.s32.totalorder %s15, 0
    %p31 = por %p29, %p30
    %p32 = scmp.ne.s32.totalorder %s20, %s21
    %p33 = scmp.eq.s32.totalorder %s16, 1
    %p34 = por %p32, %p33
    %p36 = scmp.ne.s32.totalorder %s21, %s35
    %p37 = scmp.eq.s32.totalorder %s16, 0
    %p38 = por %p36, %p37
    %s40 = sadd.s32 %s39, 1
    %p43 = scmp.eq.s32.totalorder %s10, 1
    %p44 = scmp.ne.s32.totalorder %s39, %s41
    %p45 = scmp.eq.s32.totalorder %s10, 0
    %p46 = por %p44, %p45
    %p47 = scmp.ne.s32.totalorder %s39, %s41
    %p48 = scmp.eq.s32.totalorder %s15, 1
    %p49 = por %p47, %p48
    %p50 = scmp.ne.s32.totalorder %s41, %s42
    %p51 = scmp.eq.s32.totalorder %s15, 0
    %p52 = por %p50, %p51
    %p53 = scmp.ne.s32.totalorder %s41, %s42
    %p54 = scmp.eq.s32.totalorder %s16, 1
    %p55 = por %p53, %p54
    %p57 = scmp.ne.s32.totalorder %s42, %s56
    %p58 = scmp.eq.s32.totalorder %s16, 0
    %p59 = por %p57, %p58
    %s61 = sadd.s32 %s60, 1
    %p64 = scmp.eq.s32.totalorder %s10, 1
    %p65 = scmp.ne.s32.totalorder %s60, %s62
    %p66 = scmp.eq.s32.totalorder %s10, 0
    %p67 = por %p65, %p66
    %p68 = scmp.ne.s32.totalorder %s60, %s62
    %p69 = scmp.eq.s32.totalorder %s15, 1
    %p70 = por %p68, %p69
    %p71 = scmp.ne.s32.totalorder %s62, %s63
    %p72 = scmp.eq.s32.totalorder %s15, 0
    %p73 = por %p71, %p72
    %p74 = scmp.ne.s32.totalorder %s62, %s63
    %p75 = scmp.eq.s32.totalorder %s16, 1
    %p76 = por %p74, %p75
    %p78 = scmp.ne.s32.totalorder %s63, %s77
    %p79 = scmp.eq.s32.totalorder %s16, 0
    %p80 = por %p78, %p79
    %s81 = ssub.s32 %s10, %s17
    %p82 = scmp.eq.s32.totalorder %s81, 0
    %s84 = sadd.s32 %s83, 1
    %s85 = scalar_select %p82, %s83, %s84
    %p88 = pneg %p82
    %p89 = scmp.eq.s32.totalorder %s10, 1
    %p90 = por %p88, %p89
    %p91 = scmp.ne.s32.totalorder %s83, %s86
    %p92 = scmp.eq.s32.totalorder %s10, 0
    %p93 = por %p91, %p92
    %p94 = scmp.ne.s32.totalorder %s83, %s86
    %p95 = scmp.eq.s32.totalorder %s15, 1
    %p96 = por %p94, %p95
    %p97 = scmp.ne.s32.totalorder %s86, %s87
    %p98 = scmp.eq.s32.totalorder %s15, 0
    %p99 = por %p97, %p98
    %p100 = scmp.ne.s32.totalorder %s86, %s87
    %p101 = scmp.eq.s32.totalorder %s16, 1
    %p102 = por %p100, %p101
    %p104 = scmp.ne.s32.totalorder %s87, %s103
    %p105 = scmp.eq.s32.totalorder %s16, 0
    %p106 = por %p104, %p105
    %s107 = ssub.s32 %s10, %s17
    %p108 = scmp.eq.s32.totalorder %s107, 0
    %s110 = sadd.s32 %s109, 1
    %s111 = scalar_select %p108, %s109, %s110
    %p114 = pneg %p108
    %p115 = scmp.eq.s32.totalorder %s10, 1
    %p116 = por %p114, %p115
    %p117 = scmp.ne.s32.totalorder %s109, %s112
    %p118 = scmp.eq.s32.totalorder %s10, 0
    %p119 = por %p117, %p118
    %p120 = scmp.ne.s32.totalorder %s109, %s112
    %p121 = scmp.eq.s32.totalorder %s15, 1
    %p122 = por %p120, %p121
    %p123 = scmp.ne.s32.totalorder %s112, %s113
    %p124 = scmp.eq.s32.totalorder %s15, 0
    %p125 = por %p123, %p124
    %p126 = scmp.ne.s32.totalorder %s112, %s113
    %p127 = scmp.eq.s32.totalorder %s16, 1
    %p128 = por %p126, %p127
    %p130 = scmp.ne.s32.totalorder %s113, %s129
    %p131 = scmp.eq.s32.totalorder %s16, 0
    %p132 = por %p130, %p131
    %p133 = scmp.le.s32.totalorder 1, %s10
    %p134 = scmp.lt.s32.totalorder %s10, 3
    %p135 = pnand %p133, %p134
    %p136 = pneg %p135
    // Predicated region
    $region9: #{tpu_custom_call.1} parent=5 // pred_check
      _
    $region10: #{tpu_custom_call.1} parent=5 // pred_check_branch
      %138 = sbr.rel (%p135) target = $region12
    $region11: #{tpu_custom_call.1} parent=5 // pred_region
      %s139 = ssub.s32 %s10, 1
      // Predicated region
      $region13: #{tpu_custom_call.1} parent=11 // pred_check
        %p140 = pneg %p31
      $region14: #{tpu_custom_call.1} parent=11 // pred_check_branch
        %142 = sbr.rel (%p140) target = $region16
      $region15: #{tpu_custom_call.1} parent=11 // pred_region
        _
      $region16: #{tpu_custom_call.1} parent=11 // pred_fallthru
        _
      // Predicated region
      $region17: #{tpu_custom_call.1} parent=11 // pred_check
        %p143 = pneg %p52
      $region18: #{tpu_custom_call.1} parent=11 // pred_check_branch
        %145 = sbr.rel (%p143) target = $region20
      $region19: #{tpu_custom_call.1} parent=11 // pred_region
        _
      $region20: #{tpu_custom_call.1} parent=11 // pred_fallthru
        _
      // Predicated region
      $region21: #{tpu_custom_call.1} parent=11 // pred_check
        %p146 = pneg %p73
      $region22: #{tpu_custom_call.1} parent=11 // pred_check_branch
        %148 = sbr.rel (%p146) target = $region24
      $region23: #{tpu_custom_call.1} parent=11 // pred_region
        _
      $region24: #{tpu_custom_call.1} parent=11 // pred_fallthru
        _
    $region12: #{tpu_custom_call.1} parent=5 // pred_fallthru
      _
    %p149 = scmp.lt.s32.totalorder %s10, 2
    // Predicated region
    $region25: #{tpu_custom_call.1} parent=5 // pred_check
      %p150 = pneg %p149
    $region26: #{tpu_custom_call.1} parent=5 // pred_check_branch
      %152 = sbr.rel (%p150) target = $region28
    $region27: #{tpu_custom_call.1} parent=5 // pred_region
      // Predicated region
      $region29: #{tpu_custom_call.1} parent=27 // pred_check
        %p153 = pneg %p93
      $region30: #{tpu_custom_call.1} parent=27 // pred_check_branch
        %155 = sbr.rel (%p153) target = $region32
      $region31: #{tpu_custom_call.1} parent=27 // pred_region
        %p156 = scmp.lt.s32.totalorder %s10, 1
        %s157 = scalar_select %p156, %s10, 1
        %s158 = smul.addr %s157, 2
        %s159 = smul.addr %s158, 8
        %s160 = scalar_lea.vmem %s3, %s159
      $region32: #{tpu_custom_call.1} parent=27 // pred_fallthru
        _
    $region28: #{tpu_custom_call.1} parent=5 // pred_fallthru
      _
    %p161 = scmp.le.s32.totalorder 1, %s10
    %p162 = scmp.lt.s32.totalorder %s10, 3
    %p163 = pnand %p161, %p162
    %p164 = pneg %p163
    // Predicated region
    $region33: #{tpu_custom_call.1} parent=5 // pred_check
      _
    $region34: #{tpu_custom_call.1} parent=5 // pred_check_branch
      %166 = sbr.rel (%p163) target = $region36
    $region35: #{tpu_custom_call.1} parent=5 // pred_region
      %s167 = ssub.s32 %s10, 1
      %p168 = pneg %p31
      %p169 = pneg %p28
      %p170 = pneg %p52
      %p171 = pneg %p49
      %p172 = pneg %p73
      %p173 = pneg %p70
      %p174 = scmp.lt.s32.totalorder %s15, 1
      %s175 = scalar_select %p174, %s15, 1
      %s176 = smul.addr %s175, 2
      %s177 = smul.addr %s176, 8
      %s178 = scalar_lea.vmem %s3, %s177
      %p179 = pneg %p99
      %p180 = pneg %p96
      %p181 = pneg %p125
      %p182 = pneg %p122
      %p183 = scmp.lt.s32.totalorder %s15, 1
      %s184 = scalar_select %p183, %s15, 1
      %s185 = smul.addr %s184, 2
      %s186 = smul.addr %s185, 8
      %s187 = scalar_lea.vmem %s4, %s186
      %p188 = scmp.lt.s32.totalorder %s15, 1
      %s189 = scalar_select %p188, %s15, 1
      %s190 = smul.addr %s189, 2
      %s191 = smul.addr %s190, 8
      %s192 = scalar_lea.vmem %s3, %s191
      %p193 = scmp.lt.s32.totalorder %s15, 1
      %s194 = scalar_select %p193, %s15, 1
      %s195 = smul.addr %s194, 2
      %s196 = smul.addr %s195, 8
      %s197 = scalar_lea.vmem %s4, %s196
      %v198 = vld [vmem:[%s0] sm:$0xff]
      %v199 = vld [vmem:[%s0 + $0x8] sm:$0xf]
      %v200 = vld [vmem:[%s1] sm:$0xf]
      %v201 = vld [vmem:[%s2] sm:$0xf]
      %v202 = vld [vmem:[%s192] sm:$0xff]
      %v203 = vld [vmem:[%s192 + $0x8] sm:$0xff]
      %vm204 = vcmask 130048
      %v206 = vsel %vm204, %v198, 0
      %v209 = vsel %vm204, %v199, 0
      %211 = vmatprep.subr.mxu0 0.0
      %212 = vmatpush1.msra.mxu0 0.0
      %213 = vmatprep.subr.mxu0 0.0
      %214 = vmatpush1.msra.mxu0 0.0
      %215 = vmatprep.subr.mxu0 0.0
      %216 = vmatpush1.msra.mxu0 0.0
      %217 = vmatprep.subr.mxu0 0.0
      %218 = vmatpush1.msra.mxu0 0.0
      %219 = vmatprep.subr.mxu0 0.0
      %220 = vmatpush1.msra.mxu0 0.0
      %221 = vmatprep.subr.mxu0 0.0
      %222 = vmatpush1.msra.mxu0 0.0
      %223 = vmatprep.subr.mxu0 0.0
      %224 = vmatpush1.msra.mxu0 0.0
      %225 = vmatprep.subr.mxu0 0.0
      %226 = vmatpush1.msra.mxu0 0.0
      %227 = vmatprep.subr.mxu0 0.0
      %228 = vmatpush1.msra.mxu0 0.0
      %229 = vmatprep.subr.mxu0 0.0
      %230 = vmatpush1.msra.mxu0 0.0
      %231 = vmatprep.subr.mxu0 0.0
      %232 = vmatpush1.msra.mxu0 0.0
      %233 = vmatprep.subr.mxu0 0.0
      %234 = vmatpush1.msra.mxu0 0.0
      %235 = vmatprep.subr.mxu0 0.0
      %236 = vmatpush1.msra.mxu0 0.0
      %237 = vmatprep.subr.mxu0 0.0
      %238 = vmatpush1.msra.mxu0 0.0
      %239 = vmatprep.subr.mxu0 0.0
      %240 = vmatpush1.msra.mxu0 %v203
      %241 = vmatprep.subr.mxu0 0.0
      %242 = vmatpush1.msra.mxu0 %v202
      %243 = vmatprep.subr.mxu0 0.0
      %244 = vmatpush2.msra.mxu0 0.0
      %245 = vmatprep.subr.mxu0 0.0
      %246 = vmatpush2.msra.mxu0 0.0
      %247 = vmatprep.subr.mxu0 0.0
      %248 = vmatpush2.msra.mxu0 0.0
      %249 = vmatprep.subr.mxu0 0.0
      %250 = vmatpush2.msra.mxu0 0.0
      %251 = vmatprep.subr.mxu0 0.0
      %252 = vmatpush2.msra.mxu0 0.0
      %253 = vmatprep.subr.mxu0 0.0
      %254 = vmatpush2.msra.mxu0 0.0
      %255 = vmatprep.subr.mxu0 0.0
      %256 = vmatpush2.msra.mxu0 0.0
      %257 = vmatprep.subr.mxu0 0.0
      %258 = vmatpush2.msra.mxu0 0.0
      %259 = vmatprep.subr.mxu0 0.0
      %260 = vmatpush2.msra.mxu0 0.0
      %261 = vmatprep.subr.mxu0 0.0
      %262 = vmatpush2.msra.mxu0 0.0
      %263 = vmatprep.subr.mxu0 0.0
      %264 = vmatpush2.msra.mxu0 0.0
      %265 = vmatprep.subr.mxu0 0.0
      %266 = vmatpush2.msra.mxu0 0.0
      %267 = vmatprep.subr.mxu0 0.0
      %268 = vmatpush2.msra.mxu0 0.0
      %269 = vmatprep.subr.mxu0 0.0
      %270 = vmatpush2.msra.mxu0 0.0
      %271 = vmatprep.subr.mxu0 0.0
      %272 = vmatpush2.msra.mxu0 0.0
      %273 = vmatprep.subr.mxu0 0.0
      %274 = vmatpush2.msra.mxu0 0.0
      %275 = vmatprep.mubr.f32.mxu0 0.0
      %276 = vmatmul.mubr.f32.gmra.mxu0 %v206
      %v277 = vpop.f32.mrf.mxu0
      %v278 = vadd.f32 0.0, %v277
      %v279 = vpop.f32.mrf.mxu0
      %280 = vmatprep.mubr.f32.mxu0 0.0
      %281 = vmatmul.mubr.f32.gmra.mxu0 %v209
      %v282 = vpop.f32.mrf.mxu0
      %v283 = vadd.f32 0.0, %v282
      %v284 = vpop.f32.mrf.mxu0
      %285 = vdwg.mxu0
      %v286 = vmul.f32 %v202, %v202
      %v287 = vmul.f32 %v203, %v203
      %288 = vmatprep.subr.mxu0 0.0
      %289 = vmatpush1.msra.mxu0 0.0
      %290 = vmatprep.subr.mxu0 0.0
      %291 = vmatpush1.msra.mxu0 0.0
      %292 = vmatprep.subr.mxu0 0.0
      %293 = vmatpush1.msra.mxu0 0.0
      %294 = vmatprep.subr.mxu0 0.0
      %295 = vmatpush1.msra.mxu0 0.0
      %296 = vmatprep.subr.mxu0 0.0
      %297 = vmatpush1.msra.mxu0 0.0
      %298 = vmatprep.subr.mxu0 0.0
      %299 = vmatpush1.msra.mxu0 0.0
      %300 = vmatprep.subr.mxu0 0.0
      %301 = vmatpush1.msra.mxu0 0.0
      %302 = vmatprep.subr.mxu0 0.0
      %303 = vmatpush1.msra.mxu0 0.0
      %304 = vmatprep.subr.mxu0 0.0
      %305 = vmatpush1.msra.mxu0 0.0
      %306 = vmatprep.subr.mxu0 0.0
      %307 = vmatpush1.msra.mxu0 0.0
      %308 = vmatprep.subr.mxu0 0.0
      %309 = vmatpush1.msra.mxu0 0.0
      %310 = vmatprep.subr.mxu0 0.0
      %311 = vmatpush1.msra.mxu0 0.0
      %312 = vmatprep.subr.mxu0 0.0
      %313 = vmatpush1.msra.mxu0 0.0
      %314 = vmatprep.subr.mxu0 0.0
      %315 = vmatpush1.msra.mxu0 0.0
      %316 = vmatprep.subr.mxu0 0.0
      %317 = vmatpush1.msra.mxu0 %v287
      %318 = vmatprep.subr.mxu0 0.0
      %319 = vmatpush1.msra.mxu0 %v286
      %320 = vmatprep.subr.mxu0 0.0
      %321 = vmatpush2.msra.mxu0 0.0
      %322 = vmatprep.subr.mxu0 0.0
      %323 = vmatpush2.msra.mxu0 0.0
      %324 = vmatprep.subr.mxu0 0.0
      %325 = vmatpush2.msra.mxu0 0.0
      %326 = vmatprep.subr.mxu0 0.0
      %327 = vmatpush2.msra.mxu0 0.0
      %328 = vmatprep.subr.mxu0 0.0
      %329 = vmatpush2.msra.mxu0 0.0
      %330 = vmatprep.subr.mxu0 0.0
      %331 = vmatpush2.msra.mxu0 0.0
      %332 = vmatprep.subr.mxu0 0.0
      %333 = vmatpush2.msra.mxu0 0.0
      %334 = vmatprep.subr.mxu0 0.0
      %335 = vmatpush2.msra.mxu0 0.0
      %336 = vmatprep.subr.mxu0 0.0
      %337 = vmatpush2.msra.mxu0 0.0
      %338 = vmatprep.subr.mxu0 0.0
      %339 = vmatpush2.msra.mxu0 0.0
      %340 = vmatprep.subr.mxu0 0.0
      %341 = vmatpush2.msra.mxu0 0.0
      %342 = vmatprep.subr.mxu0 0.0
      %343 = vmatpush2.msra.mxu0 0.0
      %344 = vmatprep.subr.mxu0 0.0
      %345 = vmatpush2.msra.mxu0 0.0
      %346 = vmatprep.subr.mxu0 0.0
      %347 = vmatpush2.msra.mxu0 0.0
      %348 = vmatprep.subr.mxu0 0.0
      %349 = vmatpush2.msra.mxu0 0.0
      %350 = vmatprep.subr.mxu0 0.0
      %351 = vmatpush2.msra.mxu0 0.0
      %352 = vmatprep.mubr.f32.mxu0 0.0
      %353 = vmatmul.mubr.f32.gmra.mxu0 %v206
      %v354 = vpop.f32.mrf.mxu0
      %v355 = vadd.f32 0.0, %v354
      %v356 = vpop.f32.mrf.mxu0
      %357 = vmatprep.mubr.f32.mxu0 0.0
      %358 = vmatmul.mubr.f32.gmra.mxu0 %v209
      %v359 = vpop.f32.mrf.mxu0
      %v360 = vadd.f32 0.0, %v359
      %v361 = vpop.f32.mrf.mxu0
      %362 = vdwg.mxu0
      %vm363 = vcmask 31744
      %v365 = vsel %vm363, %v202, 0
      %v368 = vsel %vm363, %v203, 0
      %vm370 = vcmask 1043456
      %v372 = vsel %vm370, %v200, 0
      %374 = vmatprep.subr.mxu0 0.0
      %375 = vmatpush1.msra.mxu0 0.0
      %376 = vmatprep.subr.mxu0 0.0
      %377 = vmatpush1.msra.mxu0 0.0
      %378 = vmatprep.subr.mxu0 0.0
      %379 = vmatpush1.msra.mxu0 0.0
      %380 = vmatprep.subr.mxu0 0.0
      %381 = vmatpush1.msra.mxu0 0.0
      %382 = vmatprep.subr.mxu0 0.0
      %383 = vmatpush1.msra.mxu0 0.0
      %384 = vmatprep.subr.mxu0 0.0
      %385 = vmatpush1.msra.mxu0 0.0
      %386 = vmatprep.subr.mxu0 0.0
      %387 = vmatpush1.msra.mxu0 0.0
      %388 = vmatprep.subr.mxu0 0.0
      %389 = vmatpush1.msra.mxu0 0.0
      %390 = vmatprep.subr.mxu0 0.0
      %391 = vmatpush1.msra.mxu0 0.0
      %392 = vmatprep.subr.mxu0 0.0
      %393 = vmatpush1.msra.mxu0 0.0
      %394 = vmatprep.subr.mxu0 0.0
      %395 = vmatpush1.msra.mxu0 0.0
      %396 = vmatprep.subr.mxu0 0.0
      %397 = vmatpush1.msra.mxu0 0.0
      %398 = vmatprep.subr.mxu0 0.0
      %399 = vmatpush1.msra.mxu0 0.0
      %400 = vmatprep.subr.mxu0 0.0
      %401 = vmatpush1.msra.mxu0 0.0
      %402 = vmatprep.subr.mxu0 0.0
      %403 = vmatpush1.msra.mxu0 0.0
      %404 = vmatprep.subr.mxu0 0.0
      %405 = vmatpush1.msra.mxu0 %v372
      %406 = vmatprep.subr.mxu0 0.0
      %407 = vmatpush2.msra.mxu0 0.0
      %408 = vmatprep.subr.mxu0 0.0
      %409 = vmatpush2.msra.mxu0 0.0
      %410 = vmatprep.subr.mxu0 0.0
      %411 = vmatpush2.msra.mxu0 0.0
      %412 = vmatprep.subr.mxu0 0.0
      %413 = vmatpush2.msra.mxu0 0.0
      %414 = vmatprep.subr.mxu0 0.0
      %415 = vmatpush2.msra.mxu0 0.0
      %416 = vmatprep.subr.mxu0 0.0
      %417 = vmatpush2.msra.mxu0 0.0
      %418 = vmatprep.subr.mxu0 0.0
      %419 = vmatpush2.msra.mxu0 0.0
      %420 = vmatprep.subr.mxu0 0.0
      %421 = vmatpush2.msra.mxu0 0.0
      %422 = vmatprep.subr.mxu0 0.0
      %423 = vmatpush2.msra.mxu0 0.0
      %424 = vmatprep.subr.mxu0 0.0
      %425 = vmatpush2.msra.mxu0 0.0
      %426 = vmatprep.subr.mxu0 0.0
      %427 = vmatpush2.msra.mxu0 0.0
      %428 = vmatprep.subr.mxu0 0.0
      %429 = vmatpush2.msra.mxu0 0.0
      %430 = vmatprep.subr.mxu0 0.0
      %431 = vmatpush2.msra.mxu0 0.0
      %432 = vmatprep.subr.mxu0 0.0
      %433 = vmatpush2.msra.mxu0 0.0
      %434 = vmatprep.subr.mxu0 0.0
      %435 = vmatpush2.msra.mxu0 0.0
      %436 = vmatprep.subr.mxu0 0.0
      %437 = vmatpush2.msra.mxu0 0.0
      %438 = vmatprep.mubr.f32.mxu0 0.0
      %439 = vmatmul.mubr.f32.gmra.mxu0 %v365
      %v440 = vpop.f32.mrf.mxu0
      %v441 = vadd.f32 0.0, %v440
      %v442 = vpop.f32.mrf.mxu0
      %443 = vmatprep.mubr.f32.mxu0 0.0
      %444 = vmatmul.mubr.f32.gmra.mxu0 %v368
      %v445 = vpop.f32.mrf.mxu0
      %v446 = vadd.f32 0.0, %v445
      %v447 = vpop.f32.mrf.mxu0
      %448 = vdwg.mxu0
      %v450 = vsel %vm370, %v201, 0
      %452 = vmatprep.subr.mxu0 0.0
      %453 = vmatpush1.msra.mxu0 0.0
      %454 = vmatprep.subr.mxu0 0.0
      %455 = vmatpush1.msra.mxu0 0.0
      %456 = vmatprep.subr.mxu0 0.0
      %457 = vmatpush1.msra.mxu0 0.0
      %458 = vmatprep.subr.mxu0 0.0
      %459 = vmatpush1.msra.mxu0 0.0
      %460 = vmatprep.subr.mxu0 0.0
      %461 = vmatpush1.msra.mxu0 0.0
      %462 = vmatprep.subr.mxu0 0.0
      %463 = vmatpush1.msra.mxu0 0.0
      %464 = vmatprep.subr.mxu0 0.0
      %465 = vmatpush1.msra.mxu0 0.0
      %466 = vmatprep.subr.mxu0 0.0
      %467 = vmatpush1.msra.mxu0 0.0
      %468 = vmatprep.subr.mxu0 0.0
      %469 = vmatpush1.msra.mxu0 0.0
      %470 = vmatprep.subr.mxu0 0.0
      %471 = vmatpush1.msra.mxu0 0.0
      %472 = vmatprep.subr.mxu0 0.0
      %473 = vmatpush1.msra.mxu0 0.0
      %474 = vmatprep.subr.mxu0 0.0
      %475 = vmatpush1.msra.mxu0 0.0
      %476 = vmatprep.subr.mxu0 0.0
      %477 = vmatpush1.msra.mxu0 0.0
      %478 = vmatprep.subr.mxu0 0.0
      %479 = vmatpush1.msra.mxu0 0.0
      %480 = vmatprep.subr.mxu0 0.0
      %481 = vmatpush1.msra.mxu0 0.0
      %482 = vmatprep.subr.mxu0 0.0
      %483 = vmatpush1.msra.mxu0 %v450
      %484 = vmatprep.subr.mxu0 0.0
      %485 = vmatpush2.msra.mxu0 0.0
      %486 = vmatprep.subr.mxu0 0.0
      %487 = vmatpush2.msra.mxu0 0.0
      %488 = vmatprep.subr.mxu0 0.0
      %489 = vmatpush2.msra.mxu0 0.0
      %490 = vmatprep.subr.mxu0 0.0
      %491 = vmatpush2.msra.mxu0 0.0
      %492 = vmatprep.subr.mxu0 0.0
      %493 = vmatpush2.msra.mxu0 0.0
      %494 = vmatprep.subr.mxu0 0.0
      %495 = vmatpush2.msra.mxu0 0.0
      %496 = vmatprep.subr.mxu0 0.0
      %497 = vmatpush2.msra.mxu0 0.0
      %498 = vmatprep.subr.mxu0 0.0
      %499 = vmatpush2.msra.mxu0 0.0
      %500 = vmatprep.subr.mxu0 0.0
      %501 = vmatpush2.msra.mxu0 0.0
      %502 = vmatprep.subr.mxu0 0.0
      %503 = vmatpush2.msra.mxu0 0.0
      %504 = vmatprep.subr.mxu0 0.0
      %505 = vmatpush2.msra.mxu0 0.0
      %506 = vmatprep.subr.mxu0 0.0
      %507 = vmatpush2.msra.mxu0 0.0
      %508 = vmatprep.subr.mxu0 0.0
      %509 = vmatpush2.msra.mxu0 0.0
      %510 = vmatprep.subr.mxu0 0.0
      %511 = vmatpush2.msra.mxu0 0.0
      %512 = vmatprep.subr.mxu0 0.0
      %513 = vmatpush2.msra.mxu0 0.0
      %514 = vmatprep.subr.mxu0 0.0
      %515 = vmatpush2.msra.mxu0 0.0
      %516 = vmatprep.mubr.f32.mxu0 0.0
      %517 = vmatmul.mubr.f32.gmra.mxu0 %v365
      %v518 = vpop.f32.mrf.mxu0
      %v519 = vadd.f32 0.0, %v518
      %v520 = vpop.f32.mrf.mxu0
      %521 = vmatprep.mubr.f32.mxu0 0.0
      %522 = vmatmul.mubr.f32.gmra.mxu0 %v368
      %v523 = vpop.f32.mrf.mxu0
      %v524 = vadd.f32 0.0, %v523
      %v525 = vpop.f32.mrf.mxu0
      %526 = vdwg.mxu0
      %v527 = vmul.f32 %v441, %v519
      %v528 = vmul.f32 %v446, %v524
      %529 = vmatprep.subr.mxu0 0.0
      %530 = vmatpush1.msra.mxu0 0.0
      %531 = vmatprep.subr.mxu0 0.0
      %532 = vmatpush1.msra.mxu0 0.0
      %533 = vmatprep.subr.mxu0 0.0
      %534 = vmatpush1.msra.mxu0 0.0
      %535 = vmatprep.subr.mxu0 0.0
      %536 = vmatpush1.msra.mxu0 0.0
      %537 = vmatprep.subr.mxu0 0.0
      %538 = vmatpush1.msra.mxu0 0.0
      %539 = vmatprep.subr.mxu0 0.0
      %540 = vmatpush1.msra.mxu0 0.0
      %541 = vmatprep.subr.mxu0 0.0
      %542 = vmatpush1.msra.mxu0 0.0
      %543 = vmatprep.subr.mxu0 0.0
      %544 = vmatpush1.msra.mxu0 0.0
      %545 = vmatprep.subr.mxu0 0.0
      %546 = vmatpush1.msra.mxu0 0.0
      %547 = vmatprep.subr.mxu0 0.0
      %548 = vmatpush1.msra.mxu0 0.0
      %549 = vmatprep.subr.mxu0 0.0
      %550 = vmatpush1.msra.mxu0 0.0
      %551 = vmatprep.subr.mxu0 0.0
      %552 = vmatpush1.msra.mxu0 0.0
      %553 = vmatprep.subr.mxu0 0.0
      %554 = vmatpush1.msra.mxu0 0.0
      %555 = vmatprep.subr.mxu0 0.0
      %556 = vmatpush1.msra.mxu0 0.0
      %557 = vmatprep.subr.mxu0 0.0
      %558 = vmatpush1.msra.mxu0 %v528
      %559 = vmatprep.subr.mxu0 0.0
      %560 = vmatpush1.msra.mxu0 %v527
      %561 = vmatprep.subr.mxu0 0.0
      %562 = vmatpush2.msra.mxu0 0.0
      %563 = vmatprep.subr.mxu0 0.0
      %564 = vmatpush2.msra.mxu0 0.0
      %565 = vmatprep.subr.mxu0 0.0
      %566 = vmatpush2.msra.mxu0 0.0
      %567 = vmatprep.subr.mxu0 0.0
      %568 = vmatpush2.msra.mxu0 0.0
      %569 = vmatprep.subr.mxu0 0.0
      %570 = vmatpush2.msra.mxu0 0.0
      %571 = vmatprep.subr.mxu0 0.0
      %572 = vmatpush2.msra.mxu0 0.0
      %573 = vmatprep.subr.mxu0 0.0
      %574 = vmatpush2.msra.mxu0 0.0
      %575 = vmatprep.subr.mxu0 0.0
      %576 = vmatpush2.msra.mxu0 0.0
      %577 = vmatprep.subr.mxu0 0.0
      %578 = vmatpush2.msra.mxu0 0.0
      %579 = vmatprep.subr.mxu0 0.0
      %580 = vmatpush2.msra.mxu0 0.0
      %581 = vmatprep.subr.mxu0 0.0
      %582 = vmatpush2.msra.mxu0 0.0
      %583 = vmatprep.subr.mxu0 0.0
      %584 = vmatpush2.msra.mxu0 0.0
      %585 = vmatprep.subr.mxu0 0.0
      %586 = vmatpush2.msra.mxu0 0.0
      %587 = vmatprep.subr.mxu0 0.0
      %588 = vmatpush2.msra.mxu0 0.0
      %589 = vmatprep.subr.mxu0 0.0
      %590 = vmatpush2.msra.mxu0 0.0
      %591 = vmatprep.subr.mxu0 0.0
      %592 = vmatpush2.msra.mxu0 0.0
      %593 = vmatprep.mubr.f32.mxu0 0.0
      %594 = vmatmul.mubr.f32.gmra.mxu0 %v206
      %v595 = vpop.f32.mrf.mxu0
      %v596 = vadd.f32 0.0, %v595
      %v597 = vpop.f32.mrf.mxu0
      %598 = vmatprep.mubr.f32.mxu0 0.0
      %599 = vmatmul.mubr.f32.gmra.mxu0 %v209
      %v600 = vpop.f32.mrf.mxu0
      %v601 = vadd.f32 0.0, %v600
      %v602 = vpop.f32.mrf.mxu0
      %603 = vdwg.mxu0
      %v605 = vsel %vm363, %v278, 0
      %v608 = vsel %vm363, %v283, 0
      %610 = vmatprep.subr.mxu0 0.0
      %611 = vmatpush1.msra.mxu0 0.0
      %612 = vmatprep.subr.mxu0 0.0
      %613 = vmatpush1.msra.mxu0 0.0
      %614 = vmatprep.subr.mxu0 0.0
      %615 = vmatpush1.msra.mxu0 0.0
      %616 = vmatprep.subr.mxu0 0.0
      %617 = vmatpush1.msra.mxu0 0.0
      %618 = vmatprep.subr.mxu0 0.0
      %619 = vmatpush1.msra.mxu0 0.0
      %620 = vmatprep.subr.mxu0 0.0
      %621 = vmatpush1.msra.mxu0 0.0
      %622 = vmatprep.subr.mxu0 0.0
      %623 = vmatpush1.msra.mxu0 0.0
      %624 = vmatprep.subr.mxu0 0.0
      %625 = vmatpush1.msra.mxu0 0.0
      %626 = vmatprep.subr.mxu0 0.0
      %627 = vmatpush1.msra.mxu0 0.0
      %628 = vmatprep.subr.mxu0 0.0
      %629 = vmatpush1.msra.mxu0 0.0
      %630 = vmatprep.subr.mxu0 0.0
      %631 = vmatpush1.msra.mxu0 0.0
      %632 = vmatprep.subr.mxu0 0.0
      %633 = vmatpush1.msra.mxu0 0.0
      %634 = vmatprep.subr.mxu0 0.0
      %635 = vmatpush1.msra.mxu0 0.0
      %636 = vmatprep.subr.mxu0 0.0
      %637 = vmatpush1.msra.mxu0 0.0
      %638 = vmatprep.subr.mxu0 0.0
      %639 = vmatpush1.msra.mxu0 0.0
      %640 = vmatprep.subr.mxu0 0.0
      %641 = vmatpush1.msra.mxu0 %v372
      %642 = vmatprep.subr.mxu0 0.0
      %643 = vmatpush2.msra.mxu0 0.0
      %644 = vmatprep.subr.mxu0 0.0
      %645 = vmatpush2.msra.mxu0 0.0
      %646 = vmatprep.subr.mxu0 0.0
      %647 = vmatpush2.msra.mxu0 0.0
      %648 = vmatprep.subr.mxu0 0.0
      %649 = vmatpush2.msra.mxu0 0.0
      %650 = vmatprep.subr.mxu0 0.0
      %651 = vmatpush2.msra.mxu0 0.0
      %652 = vmatprep.subr.mxu0 0.0
      %653 = vmatpush2.msra.mxu0 0.0
      %654 = vmatprep.subr.mxu0 0.0
      %655 = vmatpush2.msra.mxu0 0.0
      %656 = vmatprep.subr.mxu0 0.0
      %657 = vmatpush2.msra.mxu0 0.0
      %658 = vmatprep.subr.mxu0 0.0
      %659 = vmatpush2.msra.mxu0 0.0
      %660 = vmatprep.subr.mxu0 0.0
      %661 = vmatpush2.msra.mxu0 0.0
      %662 = vmatprep.subr.mxu0 0.0
      %663 = vmatpush2.msra.mxu0 0.0
      %664 = vmatprep.subr.mxu0 0.0
      %665 = vmatpush2.msra.mxu0 0.0
      %666 = vmatprep.subr.mxu0 0.0
      %667 = vmatpush2.msra.mxu0 0.0
      %668 = vmatprep.subr.mxu0 0.0
      %669 = vmatpush2.msra.mxu0 0.0
      %670 = vmatprep.subr.mxu0 0.0
      %671 = vmatpush2.msra.mxu0 0.0
      %672 = vmatprep.subr.mxu0 0.0
      %673 = vmatpush2.msra.mxu0 0.0
      %674 = vmatprep.mubr.f32.mxu0 0.0
      %675 = vmatmul.mubr.f32.gmra.mxu0 %v605
      %v676 = vpop.f32.mrf.mxu0
      %v677 = vadd.f32 0.0, %v676
      %v678 = vpop.f32.mrf.mxu0
      %679 = vmatprep.mubr.f32.mxu0 0.0
      %680 = vmatmul.mubr.f32.gmra.mxu0 %v608
      %v681 = vpop.f32.mrf.mxu0
      %v682 = vadd.f32 0.0, %v681
      %v683 = vpop.f32.mrf.mxu0
      %684 = vdwg.mxu0
      %685 = vmatprep.subr.mxu0 0.0
      %686 = vmatpush1.msra.mxu0 0.0
      %687 = vmatprep.subr.mxu0 0.0
      %688 = vmatpush1.msra.mxu0 0.0
      %689 = vmatprep.subr.mxu0 0.0
      %690 = vmatpush1.msra.mxu0 0.0
      %691 = vmatprep.subr.mxu0 0.0
      %692 = vmatpush1.msra.mxu0 0.0
      %693 = vmatprep.subr.mxu0 0.0
      %694 = vmatpush1.msra.mxu0 0.0
      %695 = vmatprep.subr.mxu0 0.0
      %696 = vmatpush1.msra.mxu0 0.0
      %697 = vmatprep.subr.mxu0 0.0
      %698 = vmatpush1.msra.mxu0 0.0
      %699 = vmatprep.subr.mxu0 0.0
      %700 = vmatpush1.msra.mxu0 0.0
      %701 = vmatprep.subr.mxu0 0.0
      %702 = vmatpush1.msra.mxu0 0.0
      %703 = vmatprep.subr.mxu0 0.0
      %704 = vmatpush1.msra.mxu0 0.0
      %705 = vmatprep.subr.mxu0 0.0
      %706 = vmatpush1.msra.mxu0 0.0
      %707 = vmatprep.subr.mxu0 0.0
      %708 = vmatpush1.msra.mxu0 0.0
      %709 = vmatprep.subr.mxu0 0.0
      %710 = vmatpush1.msra.mxu0 0.0
      %711 = vmatprep.subr.mxu0 0.0
      %712 = vmatpush1.msra.mxu0 0.0
      %713 = vmatprep.subr.mxu0 0.0
      %714 = vmatpush1.msra.mxu0 0.0
      %715 = vmatprep.subr.mxu0 0.0
      %716 = vmatpush1.msra.mxu0 %v450
      %717 = vmatprep.subr.mxu0 0.0
      %718 = vmatpush2.msra.mxu0 0.0
      %719 = vmatprep.subr.mxu0 0.0
      %720 = vmatpush2.msra.mxu0 0.0
      %721 = vmatprep.subr.mxu0 0.0
      %722 = vmatpush2.msra.mxu0 0.0
      %723 = vmatprep.subr.mxu0 0.0
      %724 = vmatpush2.msra.mxu0 0.0
      %725 = vmatprep.subr.mxu0 0.0
      %726 = vmatpush2.msra.mxu0 0.0
      %727 = vmatprep.subr.mxu0 0.0
      %728 = vmatpush2.msra.mxu0 0.0
      %729 = vmatprep.subr.mxu0 0.0
      %730 = vmatpush2.msra.mxu0 0.0
      %731 = vmatprep.subr.mxu0 0.0
      %732 = vmatpush2.msra.mxu0 0.0
      %733 = vmatprep.subr.mxu0 0.0
      %734 = vmatpush2.msra.mxu0 0.0
      %735 = vmatprep.subr.mxu0 0.0
      %736 = vmatpush2.msra.mxu0 0.0
      %737 = vmatprep.subr.mxu0 0.0
      %738 = vmatpush2.msra.mxu0 0.0
      %739 = vmatprep.subr.mxu0 0.0
      %740 = vmatpush2.msra.mxu0 0.0
      %741 = vmatprep.subr.mxu0 0.0
      %742 = vmatpush2.msra.mxu0 0.0
      %743 = vmatprep.subr.mxu0 0.0
      %744 = vmatpush2.msra.mxu0 0.0
      %745 = vmatprep.subr.mxu0 0.0
      %746 = vmatpush2.msra.mxu0 0.0
      %747 = vmatprep.subr.mxu0 0.0
      %748 = vmatpush2.msra.mxu0 0.0
      %749 = vmatprep.mubr.f32.mxu0 0.0
      %750 = vmatmul.mubr.f32.gmra.mxu0 %v605
      %v751 = vpop.f32.mrf.mxu0
      %v752 = vadd.f32 0.0, %v751
      %v753 = vpop.f32.mrf.mxu0
      %754 = vmatprep.mubr.f32.mxu0 0.0
      %755 = vmatmul.mubr.f32.gmra.mxu0 %v608
      %v756 = vpop.f32.mrf.mxu0
      %v757 = vadd.f32 0.0, %v756
      %v758 = vpop.f32.mrf.mxu0
      %759 = vdwg.mxu0
      %v761 = vsel %vm363, %v355, 0
      %v764 = vsel %vm363, %v360, 0
      %766 = vmatprep.subr.mxu0 0.0
      %767 = vmatpush1.msra.mxu0 0.0
      %768 = vmatprep.subr.mxu0 0.0
      %769 = vmatpush1.msra.mxu0 0.0
      %770 = vmatprep.subr.mxu0 0.0
      %771 = vmatpush1.msra.mxu0 0.0
      %772 = vmatprep.subr.mxu0 0.0
      %773 = vmatpush1.msra.mxu0 0.0
      %774 = vmatprep.subr.mxu0 0.0
      %775 = vmatpush1.msra.mxu0 0.0
      %776 = vmatprep.subr.mxu0 0.0
      %777 = vmatpush1.msra.mxu0 0.0
      %778 = vmatprep.subr.mxu0 0.0
      %779 = vmatpush1.msra.mxu0 0.0
      %780 = vmatprep.subr.mxu0 0.0
      %781 = vmatpush1.msra.mxu0 0.0
      %782 = vmatprep.subr.mxu0 0.0
      %783 = vmatpush1.msra.mxu0 0.0
      %784 = vmatprep.subr.mxu0 0.0
      %785 = vmatpush1.msra.mxu0 0.0
      %786 = vmatprep.subr.mxu0 0.0
      %787 = vmatpush1.msra.mxu0 0.0
      %788 = vmatprep.subr.mxu0 0.0
      %789 = vmatpush1.msra.mxu0 0.0
      %790 = vmatprep.subr.mxu0 0.0
      %791 = vmatpush1.msra.mxu0 0.0
      %792 = vmatprep.subr.mxu0 0.0
      %793 = vmatpush1.msra.mxu0 0.0
      %794 = vmatprep.subr.mxu0 0.0
      %795 = vmatpush1.msra.mxu0 0.0
      %796 = vmatprep.subr.mxu0 0.0
      %797 = vmatpush1.msra.mxu0 %v372
      %798 = vmatprep.subr.mxu0 0.0
      %799 = vmatpush2.msra.mxu0 0.0
      %800 = vmatprep.subr.mxu0 0.0
      %801 = vmatpush2.msra.mxu0 0.0
      %802 = vmatprep.subr.mxu0 0.0
      %803 = vmatpush2.msra.mxu0 0.0
      %804 = vmatprep.subr.mxu0 0.0
      %805 = vmatpush2.msra.mxu0 0.0
      %806 = vmatprep.subr.mxu0 0.0
      %807 = vmatpush2.msra.mxu0 0.0
      %808 = vmatprep.subr.mxu0 0.0
      %809 = vmatpush2.msra.mxu0 0.0
      %810 = vmatprep.subr.mxu0 0.0
      %811 = vmatpush2.msra.mxu0 0.0
      %812 = vmatprep.subr.mxu0 0.0
      %813 = vmatpush2.msra.mxu0 0.0
      %814 = vmatprep.subr.mxu0 0.0
      %815 = vmatpush2.msra.mxu0 0.0
      %816 = vmatprep.subr.mxu0 0.0
      %817 = vmatpush2.msra.mxu0 0.0
      %818 = vmatprep.subr.mxu0 0.0
      %819 = vmatpush2.msra.mxu0 0.0
      %820 = vmatprep.subr.mxu0 0.0
      %821 = vmatpush2.msra.mxu0 0.0
      %822 = vmatprep.subr.mxu0 0.0
      %823 = vmatpush2.msra.mxu0 0.0
      %824 = vmatprep.subr.mxu0 0.0
      %825 = vmatpush2.msra.mxu0 0.0
      %826 = vmatprep.subr.mxu0 0.0
      %827 = vmatpush2.msra.mxu0 0.0
      %828 = vmatprep.subr.mxu0 0.0
      %829 = vmatpush2.msra.mxu0 0.0
      %830 = vmatprep.mubr.f32.mxu0 0.0
      %831 = vmatmul.mubr.f32.gmra.mxu0 %v761
      %v832 = vpop.f32.mrf.mxu0
      %v833 = vadd.f32 0.0, %v832
      %v834 = vpop.f32.mrf.mxu0
      %835 = vmatprep.mubr.f32.mxu0 0.0
      %836 = vmatmul.mubr.f32.gmra.mxu0 %v764
      %v837 = vpop.f32.mrf.mxu0
      %v838 = vadd.f32 0.0, %v837
      %v839 = vpop.f32.mrf.mxu0
      %840 = vdwg.mxu0
      %841 = vmatprep.subr.mxu0 0.0
      %842 = vmatpush1.msra.mxu0 0.0
      %843 = vmatprep.subr.mxu0 0.0
      %844 = vmatpush1.msra.mxu0 0.0
      %845 = vmatprep.subr.mxu0 0.0
      %846 = vmatpush1.msra.mxu0 0.0
      %847 = vmatprep.subr.mxu0 0.0
      %848 = vmatpush1.msra.mxu0 0.0
      %849 = vmatprep.subr.mxu0 0.0
      %850 = vmatpush1.msra.mxu0 0.0
      %851 = vmatprep.subr.mxu0 0.0
      %852 = vmatpush1.msra.mxu0 0.0
      %853 = vmatprep.subr.mxu0 0.0
      %854 = vmatpush1.msra.mxu0 0.0
      %855 = vmatprep.subr.mxu0 0.0
      %856 = vmatpush1.msra.mxu0 0.0
      %857 = vmatprep.subr.mxu0 0.0
      %858 = vmatpush1.msra.mxu0 0.0
      %859 = vmatprep.subr.mxu0 0.0
      %860 = vmatpush1.msra.mxu0 0.0
      %861 = vmatprep.subr.mxu0 0.0
      %862 = vmatpush1.msra.mxu0 0.0
      %863 = vmatprep.subr.mxu0 0.0
      %864 = vmatpush1.msra.mxu0 0.0
      %865 = vmatprep.subr.mxu0 0.0
      %866 = vmatpush1.msra.mxu0 0.0
      %867 = vmatprep.subr.mxu0 0.0
      %868 = vmatpush1.msra.mxu0 0.0
      %869 = vmatprep.subr.mxu0 0.0
      %870 = vmatpush1.msra.mxu0 0.0
      %871 = vmatprep.subr.mxu0 0.0
      %872 = vmatpush1.msra.mxu0 %v450
      %873 = vmatprep.subr.mxu0 0.0
      %874 = vmatpush2.msra.mxu0 0.0
      %875 = vmatprep.subr.mxu0 0.0
      %876 = vmatpush2.msra.mxu0 0.0
      %877 = vmatprep.subr.mxu0 0.0
      %878 = vmatpush2.msra.mxu0 0.0
      %879 = vmatprep.subr.mxu0 0.0
      %880 = vmatpush2.msra.mxu0 0.0
      %881 = vmatprep.subr.mxu0 0.0
      %882 = vmatpush2.msra.mxu0 0.0
      %883 = vmatprep.subr.mxu0 0.0
      %884 = vmatpush2.msra.mxu0 0.0
      %885 = vmatprep.subr.mxu0 0.0
      %886 = vmatpush2.msra.mxu0 0.0
      %887 = vmatprep.subr.mxu0 0.0
      %888 = vmatpush2.msra.mxu0 0.0
      %889 = vmatprep.subr.mxu0 0.0
      %890 = vmatpush2.msra.mxu0 0.0
      %891 = vmatprep.subr.mxu0 0.0
      %892 = vmatpush2.msra.mxu0 0.0
      %893 = vmatprep.subr.mxu0 0.0
      %894 = vmatpush2.msra.mxu0 0.0
      %895 = vmatprep.subr.mxu0 0.0
      %896 = vmatpush2.msra.mxu0 0.0
      %897 = vmatprep.subr.mxu0 0.0
      %898 = vmatpush2.msra.mxu0 0.0
      %899 = vmatprep.subr.mxu0 0.0
      %900 = vmatpush2.msra.mxu0 0.0
      %901 = vmatprep.subr.mxu0 0.0
      %902 = vmatpush2.msra.mxu0 0.0
      %903 = vmatprep.subr.mxu0 0.0
      %904 = vmatpush2.msra.mxu0 0.0
      %905 = vmatprep.mubr.f32.mxu0 0.0
      %906 = vmatmul.mubr.f32.gmra.mxu0 %v761
      %v907 = vpop.f32.mrf.mxu0
      %v908 = vadd.f32 0.0, %v907
      %v909 = vpop.f32.mrf.mxu0
      %910 = vmatprep.mubr.f32.mxu0 0.0
      %911 = vmatmul.mubr.f32.gmra.mxu0 %v764
      %v912 = vpop.f32.mrf.mxu0
      %v913 = vadd.f32 0.0, %v912
      %v914 = vpop.f32.mrf.mxu0
      %915 = vdwg.mxu0
      %v916 = vmul.f32 %v677, 0.2
      %v917 = vmul.f32 %v682, 0.2
      %v918 = vmul.f32 %v752, 0.2
      %v919 = vmul.f32 %v757, 0.2
      %v920 = vmul.f32 %v677, %v916
      %v921 = vmul.f32 %v682, %v917
      %v922 = vsub.f32 %v833, %v920
      %v923 = vsub.f32 %v838, %v921
      %v924 = vmax.f32 %v922, 0.0
      %v925 = vmax.f32 %v923, 0.0
      %v926 = vmul.f32 %v924, 0.25
      %v927 = vmul.f32 %v925, 0.25
      %v928 = vmul.f32 %v752, %v918
      %v929 = vmul.f32 %v757, %v919
      %v930 = vsub.f32 %v908, %v928
      %v931 = vsub.f32 %v913, %v929
      %v932 = vmax.f32 %v930, 0.0
      %v933 = vmax.f32 %v931, 0.0
      %v934 = vmul.f32 %v932, 0.25
      %v935 = vmul.f32 %v933, 0.25
      %v936 = vrsqrt.pop %v926
      %v937 = vmul.f32 %v926, %v936
      %vm938 = vcmp.eq.f32.partialorder %v926, inf
      %v939 = vsel %vm938, %v926, %v937
      %vm940 = vcmp.eq.f32.partialorder %v926, 0.0
      %v941 = vand.u32 %v926, 2147483648
      %v942 = vsel %vm940, %v941, %v939
      %v943 = vrsqrt.pop %v927
      %v944 = vmul.f32 %v927, %v943
      %vm945 = vcmp.eq.f32.partialorder %v927, inf
      %v946 = vsel %vm945, %v927, %v944
      %vm947 = vcmp.eq.f32.partialorder %v927, 0.0
      %v948 = vand.u32 %v927, 2147483648
      %v949 = vsel %vm947, %v948, %v946
      %v950 = vadd.f32 %v942, 1e-05
      %v951 = vadd.f32 %v949, 1e-05
      %v952 = vrsqrt.pop %v934
      %v953 = vmul.f32 %v934, %v952
      %vm954 = vcmp.eq.f32.partialorder %v934, inf
      %v955 = vsel %vm954, %v934, %v953
      %vm956 = vcmp.eq.f32.partialorder %v934, 0.0
      %v957 = vand.u32 %v934, 2147483648
      %v958 = vsel %vm956, %v957, %v955
      %v959 = vrsqrt.pop %v935
      %v960 = vmul.f32 %v935, %v959
      %vm961 = vcmp.eq.f32.partialorder %v935, inf
      %v962 = vsel %vm961, %v935, %v960
      %vm963 = vcmp.eq.f32.partialorder %v935, 0.0
      %v964 = vand.u32 %v935, 2147483648
      %v965 = vsel %vm963, %v964, %v962
      %v966 = vadd.f32 %v958, 1e-05
      %v967 = vadd.f32 %v965, 1e-05
      %v968 = vmul.f32 %v596, 0.2
      %v969 = vmul.f32 %v601, 0.2
      %v970 = vmul.f32 %v916, %v918
      %v971 = vmul.f32 %v917, %v919
      %v972 = vsub.f32 %v968, %v970
      %v973 = vsub.f32 %v969, %v971
      %v974 = vmul.f32 %v950, %v966
      %v975 = vmul.f32 %v951, %v967
      %v976 = vrcp.pop %v974
      %v977 = vmul.f32 %v972, %v976
      %v978 = vrcp.pop %v975
      %v979 = vmul.f32 %v973, %v978
      %vm980 = vcmask 48128
      %981 = vst.msk [vmem:[%s197] sm:$0xff] %vm980, %v977
      %vm982 = vcmask 44032
      %983 = vst.msk [vmem:[%s197 + $0x8] sm:$0xf] %vm982, %v979
      %p984 = scmp.lt.s32.totalorder %s15, 1
      %s985 = scalar_select %p984, %s15, 1
      %s986 = smul.addr %s985, 2
      %s987 = smul.addr %s986, 8
      %s988 = scalar_lea.vmem %s4, %s987
      // Predicated region
      $region37: #{tpu_custom_call.1} parent=35 // pred_check
        %p989 = pneg %p122
      $region38: #{tpu_custom_call.1} parent=35 // pred_check_branch
        %991 = sbr.rel (%p989) target = $region40
      $region39: #{tpu_custom_call.1} parent=35 // pred_region
        _
      $region40: #{tpu_custom_call.1} parent=35 // pred_fallthru
        _
    $region36: #{tpu_custom_call.1} parent=5 // pred_fallthru
      _
    %p992 = scmp.le.s32.totalorder 2, %s10
    // Predicated region
    $region41: #{tpu_custom_call.1} parent=5 // pred_check
      %p993 = pneg %p992
    $region42: #{tpu_custom_call.1} parent=5 // pred_check_branch
      %995 = sbr.rel (%p993) target = $region44
    $region43: #{tpu_custom_call.1} parent=5 // pred_region
      %s996 = ssub.s32 %s10, 2
      // Predicated region
      $region45: #{tpu_custom_call.1} parent=43 // pred_check
        %p997 = pneg %p128
      $region46: #{tpu_custom_call.1} parent=43 // pred_check_branch
        %999 = sbr.rel (%p997) target = $region48
      $region47: #{tpu_custom_call.1} parent=43 // pred_region
        %p1000 = scmp.lt.s32.totalorder %s16, 1
        %s1001 = scalar_select %p1000, %s16, 1
        %s1002 = smul.addr %s1001, 2
        %s1003 = smul.addr %s1002, 8
        %s1004 = scalar_lea.vmem %s4, %s1003
      $region48: #{tpu_custom_call.1} parent=43 // pred_fallthru
        _
    $region44: #{tpu_custom_call.1} parent=5 // pred_fallthru
      _
  $region6: #{tpu_custom_call.1} parent=0 // loop_footer
    %s14 = sadd.s32 1, %s10
  $region7: #{tpu_custom_call.1} parent=0 // loop_footer_branch
    %9 = sbr.rel target = $region3
  $region8: #{tpu_custom_call.1} parent=0 // loop_exit
    _

</llo_original>
